<compile_context>
chip_gen: v7x
topology: tpu7x:2x2x1
jax: 0.10.0
libtpu: 0.0.40
codegen_flags: <defaults>
</compile_context>

<pallas_src>
import functools

import numpy as np
import jax
import jax.numpy as jnp
from jax.experimental import pallas as pl
from jax.experimental.pallas import tpu as pltpu

LANES = 128


def _residual_block_kernel(x_ref, a1_ref, b1_ref, a2_ref, b2_ref, out_ref, *,
                           rows_per_image, neg_slope):
    # x_ref  : (M, 128) lane-dense slab of the whole batch (M = N * R)
    # a*_ref : (3*128, 128) structured conv-(+BN-scale) matrices
    # b*_ref : (1, 128)     BN bias tiled per lane
    x = x_ref[...].astype(jnp.float32)                       # (M, 128)
    m_rows = x.shape[0]

    # Per-image boundary masks, built once and reused by both convs.
    # Row r has a valid "previous"/"next" row only inside its own image.
    row = jax.lax.broadcasted_iota(jnp.int32, (m_rows, 1), 0)
    r_in_img = row % rows_per_image
    has_prev = r_in_img != 0
    has_next = r_in_img != rows_per_image - 1

    a1 = a1_ref[...]
    b1 = b1_ref[...]
    a2 = a2_ref[...]
    b2 = b2_ref[...]

    def conv_bn(v, a, b):
        # Neighbouring slab rows via XLU sublane rotation + VPU mask (zero row
        # at every image boundary == H zero-padding / image isolation).
        prev = jnp.where(has_prev, pltpu.roll(v, shift=1, axis=0), 0.0)
        nxt = jnp.where(has_next, pltpu.roll(v, shift=m_rows - 1, axis=0), 0.0)
        stacked = jnp.concatenate([prev, v, nxt], axis=1)     # (M, 3*128)
        y = jnp.dot(stacked, a, preferred_element_type=jnp.float32)  # one MXU matmul
        return y + b

    # conv1 + BN1 + LeakyReLU
    h1 = conv_bn(x, a1, b1)
    h1 = jnp.where(h1 >= 0, h1, neg_slope * h1)

    # conv2 + BN2 (identity activation)
    h2 = conv_bn(h1, a2, b2)

    # residual add on the unpadded slab; lane-dense store.
    out_ref[...] = (x + h2).astype(out_ref.dtype)


def _build_conv_matrix(w_hwio, scale, H, W, C):
    """Build (3*128, 128) matrix A such that, for slab rows r of one image,
       concat(slab[r-1], slab[r], slab[r+1]) @ A == (conv3x3(x) * scale)[slab r].

    Encodes kh/kw taps, W zero-padding (banded structure), Cin->Cout mixing and
    the folded BatchNorm scale.  H zero-padding is provided by the zeroed
    neighbour rows substituted at image boundaries inside the kernel."""
    WC = W * C
    assert LANES % WC == 0 and LANES % C == 0
    hpl = LANES // WC                       # image rows per slab row

    j = np.arange(3 * LANES)
    blk, jr = np.divmod(j, LANES)           # blk: 0 -> r-1, 1 -> r, 2 -> r+1
    p_in, rem_in = np.divmod(jr, WC)
    w_in, ci = np.divmod(rem_in, C)
    h_in = (blk - 1) * hpl + p_in           # image row relative to slab row r

    l = np.arange(LANES)
    p_out, rem_out = np.divmod(l, WC)
    w_out, co = np.divmod(rem_out, C)
    h_out = p_out

    kh = h_in[:, None] - h_out[None, :] + 1
    kw = w_in[:, None] - w_out[None, :] + 1
    valid = (kh >= 0) & (kh <= 2) & (kw >= 0) & (kw <= 2)
    idx = ((np.clip(kh, 0, 2) * 3 + np.clip(kw, 0, 2)) * C
           + ci[:, None]) * C + co[None, :]

    w_flat = w_hwio.astype(jnp.float32).reshape(9 * C * C)
    a = jnp.where(jnp.asarray(valid), w_flat[jnp.asarray(idx)], 0.0)
    # fold the BatchNorm scale into the output channels (matrix columns)
    scale_lane = jnp.tile(scale.astype(jnp.float32), LANES // C)
    return (a * scale_lane[None, :]).astype(jnp.float32)


def residual_block_2d(x, w1, w2, scale1, bias1, scale2, bias2, *,
                      neg_slope=0.01):
    """x: (N, H, W, C) f32.  w1/w2: (3, 3, Cin, Cout) HWIO.  scale/bias: (C,)."""
    N, H, W, C = x.shape
    # TODO(synk): layout precondition restricts supported (W, C); no fallback.
    assert (H * W * C) % LANES == 0 and LANES % (W * C) == 0
    R = (H * W * C) // LANES
    M = N * R

    a1 = _build_conv_matrix(w1, scale1, H, W, C)
    a2 = _build_conv_matrix(w2, scale2, H, W, C)
    b1 = jnp.tile(bias1.astype(jnp.float32), LANES // C).reshape(1, LANES)
    b2 = jnp.tile(bias2.astype(jnp.float32), LANES // C).reshape(1, LANES)

    x_slab = x.reshape(M, LANES)            # lane-dense view (free reshape)

    kernel = functools.partial(_residual_block_kernel,
                               rows_per_image=R, neg_slope=neg_slope)
    vmem_spec = pl.BlockSpec(memory_space=pltpu.MemorySpace.VMEM)
    out = pl.pallas_call(
        kernel,
        out_shape=jax.ShapeDtypeStruct((M, LANES), x.dtype),
        in_specs=[vmem_spec, vmem_spec, vmem_spec, vmem_spec, vmem_spec],
        out_specs=vmem_spec,
    )(x_slab, a1, b1, a2, b2)
    return out.reshape(N, H, W, C)


def _reference(x, w1, w2, s1, b1, s2, b2, neg_slope):
    conv = lambda a, w: jax.lax.conv_general_dilated(
        a, w, window_strides=(1, 1), padding='SAME',
        dimension_numbers=('NHWC', 'HWIO', 'NHWC'))
    h = conv(x, w1) * s1 + b1
    h = jnp.where(h >= 0, h, neg_slope * h)
    h = conv(h, w2) * s2 + b2
    return x + h


if __name__ == "__main__":
    # Module forward implies NCHW input (2, 4, 16, 16); transpose to NHWC.
    N, C, H, W = 2, 4, 16, 16
    key = jax.random.PRNGKey(0)
    ks = jax.random.split(key, 12)

    x_nchw = jax.random.normal(ks[0], (N, C, H, W), jnp.float32)
    x = jnp.transpose(x_nchw, (0, 2, 3, 1))                  # NCHW -> NHWC

    w1 = 0.2 * jax.random.normal(ks[1], (3, 3, C, C), jnp.float32)  # HWIO
    w2 = 0.2 * jax.random.normal(ks[2], (3, 3, C, C), jnp.float32)  # HWIO

    # BatchNorm2d parameters (eval mode), folded into scale/bias.
    eps = 1e-5
    gamma1 = 1.0 + 0.1 * jax.random.normal(ks[3], (C,), jnp.float32)
    beta1 = 0.1 * jax.random.normal(ks[4], (C,), jnp.float32)
    mean1 = 0.1 * jax.random.normal(ks[5], (C,), jnp.float32)
    var1 = jnp.abs(1.0 + 0.1 * jax.random.normal(ks[6], (C,), jnp.float32))
    gamma2 = 1.0 + 0.1 * jax.random.normal(ks[7], (C,), jnp.float32)
    beta2 = 0.1 * jax.random.normal(ks[8], (C,), jnp.float32)
    mean2 = 0.1 * jax.random.normal(ks[9], (C,), jnp.float32)
    var2 = jnp.abs(1.0 + 0.1 * jax.random.normal(ks[10], (C,), jnp.float32))

    scale1 = gamma1 / jnp.sqrt(var1 + eps)
    bias1 = beta1 - mean1 * scale1
    scale2 = gamma2 / jnp.sqrt(var2 + eps)
    bias2 = beta2 - mean2 * scale2

    neg_slope = 0.01  # nn.LeakyReLU default

    out = residual_block_2d(x, w1, w2, scale1, bias1, scale2, bias2,
                            neg_slope=neg_slope)
    out = jax.block_until_ready(out)

    ref = _reference(x, w1, w2, scale1, bias1, scale2, bias2, neg_slope)
    ref = jax.block_until_ready(ref)

    assert out.shape == (N, H, W, C)
    assert jnp.allclose(out, ref, rtol=1e-3, atol=1e-3), (
        float(jnp.max(jnp.abs(out - ref))))
    print("KERNEL_OK")
</pallas_src>

<mosaic_0001>
module attributes {stable_mosaic.version = 11 : i64} {
  func.func @_residual_block_kernel(%arg0: memref<16x128xf32, #tpu.memory_space<vmem>>, %arg1: memref<384x128xf32, #tpu.memory_space<vmem>>, %arg2: memref<1x128xf32, #tpu.memory_space<vmem>>, %arg3: memref<384x128xf32, #tpu.memory_space<vmem>>, %arg4: memref<1x128xf32, #tpu.memory_space<vmem>>, %arg5: memref<16x128xf32, #tpu.memory_space<vmem>>) attributes {dimension_semantics = [], scalar_prefetch = 0 : i64, scratch_operands = 0 : i64, tpu.core_type = #tpu.core_type<tc>} {
    %c0 = arith.constant 0 : index
    %c0_0 = arith.constant 0 : index
    %0 = vector.load %arg0[%c0, %c0_0] : memref<16x128xf32, #tpu.memory_space<vmem>>, vector<16x128xf32>
    %1 = tpu.iota {dimensions = array<i32: 0>} : vector<16x1xi32>
    %c8_i32 = arith.constant 8 : i32
    %c0_i32 = arith.constant 0 : i32
    %2 = arith.cmpi eq, %c8_i32, %c0_i32 : i32
    %c1_i32 = arith.constant 1 : i32
    %3 = arith.select %2, %c1_i32, %c8_i32 : i32
    %4 = vector.broadcast %3 : i32 to vector<16x1xi32>
    %5 = arith.remsi %1, %4 : vector<16x1xi32>
    %c0_i32_1 = arith.constant 0 : i32
    %6 = vector.broadcast %c0_i32_1 : i32 to vector<16x1xi32>
    %7 = arith.cmpi ne, %5, %6 : vector<16x1xi32>
    %c0_i32_2 = arith.constant 0 : i32
    %8 = vector.broadcast %c0_i32_2 : i32 to vector<16x1xi32>
    %9 = arith.cmpi slt, %5, %8 : vector<16x1xi32>
    %c0_i32_3 = arith.constant 0 : i32
    %10 = arith.cmpi slt, %3, %c0_i32_3 : i32
    %11 = vector.broadcast %10 : i1 to vector<16x1xi1>
    %12 = vector.broadcast %11 : vector<16x1xi1> to vector<16x1xi1>
    %13 = arith.xori %9, %12 : vector<16x1xi1>
    %14 = arith.andi %13, %7 : vector<16x1xi1>
    %15 = vector.broadcast %3 : i32 to vector<16x1xi32>
    %16 = arith.addi %5, %15 : vector<16x1xi32>
    %17 = arith.select %14, %16, %5 : vector<16x1xi1>, vector<16x1xi32>
    %c0_i32_4 = arith.constant 0 : i32
    %18 = vector.broadcast %c0_i32_4 : i32 to vector<16x1xi32>
    %19 = arith.cmpi ne, %17, %18 : vector<16x1xi32>
    %c7_i32 = arith.constant 7 : i32
    %20 = vector.broadcast %c7_i32 : i32 to vector<16x1xi32>
    %21 = arith.cmpi ne, %17, %20 : vector<16x1xi32>
    %c0_5 = arith.constant 0 : index
    %c0_6 = arith.constant 0 : index
    %22 = vector.load %arg1[%c0_5, %c0_6] : memref<384x128xf32, #tpu.memory_space<vmem>>, vector<384x128xf32>
    %c0_7 = arith.constant 0 : index
    %c0_8 = arith.constant 0 : index
    %23 = vector.load %arg2[%c0_7, %c0_8] : memref<1x128xf32, #tpu.memory_space<vmem>>, vector<1x128xf32>
    %c0_9 = arith.constant 0 : index
    %c0_10 = arith.constant 0 : index
    %24 = vector.load %arg3[%c0_9, %c0_10] : memref<384x128xf32, #tpu.memory_space<vmem>>, vector<384x128xf32>
    %c0_11 = arith.constant 0 : index
    %c0_12 = arith.constant 0 : index
    %25 = vector.load %arg4[%c0_11, %c0_12] : memref<1x128xf32, #tpu.memory_space<vmem>>, vector<1x128xf32>
    %c1_i32_13 = arith.constant 1 : i32
    %26 = tpu.dynamic_rotate %0 by %c1_i32_13 dim 0 : vector<16x128xf32>, i32 -> vector<16x128xf32>
    %cst = arith.constant 0.000000e+00 : f32
    %27 = vector.shape_cast %19 : vector<16x1xi1> to vector<16x1xi1>
    %28 = vector.broadcast %27 : vector<16x1xi1> to vector<16x128xi1>
    %29 = vector.broadcast %cst : f32 to vector<16x128xf32>
    %30 = arith.select %28, %26, %29 : vector<16x128xi1>, vector<16x128xf32>
    %c15_i32 = arith.constant 15 : i32
    %31 = tpu.dynamic_rotate %0 by %c15_i32 dim 0 : vector<16x128xf32>, i32 -> vector<16x128xf32>
    %cst_14 = arith.constant 0.000000e+00 : f32
    %32 = vector.shape_cast %21 : vector<16x1xi1> to vector<16x1xi1>
    %33 = vector.broadcast %32 : vector<16x1xi1> to vector<16x128xi1>
    %34 = vector.broadcast %cst_14 : f32 to vector<16x128xf32>
    %35 = arith.select %33, %31, %34 : vector<16x128xi1>, vector<16x128xf32>
    %36 = tpu.concatenate %30, %0, %35 in 1 : vector<16x128xf32>, vector<16x128xf32>, vector<16x128xf32> -> vector<16x384xf32>
    %cst_15 = arith.constant dense<0.000000e+00> : vector<16x128xf32>
    %37 = tpu.matmul %36, %22, %cst_15 {dimension_numbers = #tpu.dot_dimension_numbers<[1], [0], [0], [1], [0, 0, 1, 1], [], []>} : vector<16x384xf32>, vector<384x128xf32>, vector<16x128xf32> -> vector<16x128xf32>
    %38 = vector.broadcast %23 : vector<1x128xf32> to vector<16x128xf32>
    %39 = arith.addf %37, %38 : vector<16x128xf32>
    %cst_16 = arith.constant 0.000000e+00 : f32
    %40 = vector.broadcast %cst_16 : f32 to vector<16x128xf32>
    %41 = arith.cmpf oge, %39, %40 : vector<16x128xf32>
    %cst_17 = arith.constant 0.00999999977 : f32
    %42 = vector.broadcast %cst_17 : f32 to vector<16x128xf32>
    %43 = arith.mulf %42, %39 : vector<16x128xf32>
    %44 = arith.select %41, %39, %43 : vector<16x128xi1>, vector<16x128xf32>
    %c1_i32_18 = arith.constant 1 : i32
    %45 = tpu.dynamic_rotate %44 by %c1_i32_18 dim 0 : vector<16x128xf32>, i32 -> vector<16x128xf32>
    %cst_19 = arith.constant 0.000000e+00 : f32
    %46 = vector.shape_cast %19 : vector<16x1xi1> to vector<16x1xi1>
    %47 = vector.broadcast %46 : vector<16x1xi1> to vector<16x128xi1>
    %48 = vector.broadcast %cst_19 : f32 to vector<16x128xf32>
    %49 = arith.select %47, %45, %48 : vector<16x128xi1>, vector<16x128xf32>
    %c15_i32_20 = arith.constant 15 : i32
    %50 = tpu.dynamic_rotate %44 by %c15_i32_20 dim 0 : vector<16x128xf32>, i32 -> vector<16x128xf32>
    %cst_21 = arith.constant 0.000000e+00 : f32
    %51 = vector.shape_cast %21 : vector<16x1xi1> to vector<16x1xi1>
    %52 = vector.broadcast %51 : vector<16x1xi1> to vector<16x128xi1>
    %53 = vector.broadcast %cst_21 : f32 to vector<16x128xf32>
    %54 = arith.select %52, %50, %53 : vector<16x128xi1>, vector<16x128xf32>
    %55 = tpu.concatenate %49, %44, %54 in 1 : vector<16x128xf32>, vector<16x128xf32>, vector<16x128xf32> -> vector<16x384xf32>
    %cst_22 = arith.constant dense<0.000000e+00> : vector<16x128xf32>
    %56 = tpu.matmul %55, %24, %cst_22 {dimension_numbers = #tpu.dot_dimension_numbers<[1], [0], [0], [1], [0, 0, 1, 1], [], []>} : vector<16x384xf32>, vector<384x128xf32>, vector<16x128xf32> -> vector<16x128xf32>
    %57 = vector.broadcast %25 : vector<1x128xf32> to vector<16x128xf32>
    %58 = arith.addf %56, %57 : vector<16x128xf32>
    %59 = arith.addf %0, %58 : vector<16x128xf32>
    %c0_23 = arith.constant 0 : index
    %c0_24 = arith.constant 0 : index
    %60 = vector.load %arg5[%c0_23, %c0_24] : memref<16x128xf32, #tpu.memory_space<vmem>>, vector<16x128xf32>
    tpu.vector_store %arg5[%c0_23, %c0_24], %59 {strides = array<i32>} : memref<16x128xf32, #tpu.memory_space<vmem>>, vector<16x128xf32>,
    return
  }
}

</mosaic_0001>

<llo_original>
// kernel: tpu_custom_call.1
$region0: #{tpu_custom_call.1}
  #allocation0 [shape = 'u32[]', space=smem, size = 0x4, offset = 0x4, fixed_abs, tag = 'smem constant byte address 0x4 - core index']
  #allocation1 [shape = 'u32[144,128]{1,0:T(1,128)}', space=vmem, size = 0x12000, scoped, tag = 'internal scratch']
  %s0 = inlined_call_operand.hbm [shape: f32[16,128], index: 0, kind: input, shape index: {}]
  %s1 = inlined_call_operand.hbm [shape: f32[384,128], index: 1, kind: input, shape index: {}]
  %s2 = inlined_call_operand.vmem [shape: f32[1,128], index: 2, kind: input, shape index: {}]
  %s3 = inlined_call_operand.hbm [shape: f32[384,128], index: 3, kind: input, shape index: {}]
  %s4 = inlined_call_operand.vmem [shape: f32[1,128], index: 4, kind: input, shape index: {}]
  %s5 = inlined_call_operand.hbm [shape: f32[16,128], index: 5, kind: output, shape index: {}]
  %s6 = sld [smem:[#allocation0]]
  $region42: #{tpu_custom_call.1} parent=0
    _
  %s8 = ssub.s32 1, %s6
  %s9 = scalar_select 0, %s8, %s6
  $region1: #{tpu_custom_call.1} parent=0
    #allocation2 [shape = 'u8[8192]{0}', space=vmem, size = 0x2000, scoped, tag = 'input window, operand 0, single buffered']
    #allocation3 [shape = 's32[1]{0}', space=sflag, size = 0x4, scoped, tag = 'scoped memory for tpu_custom_call.1']
    #allocation4 [shape = 's32[1]{0}', space=sflag, size = 0x4, scoped, tag = 'scoped memory for tpu_custom_call.1']
    #allocation5 [shape = 'u8[196608]{0}', space=vmem, size = 0x30000, scoped, tag = 'input window, operand 1, single buffered']
    #allocation6 [shape = 's32[1]{0}', space=sflag, size = 0x4, scoped, tag = 'scoped memory for tpu_custom_call.1']
    #allocation7 [shape = 'u8[196608]{0}', space=vmem, size = 0x30000, scoped, tag = 'input window, operand 3, single buffered']
    #allocation8 [shape = 'u8[8192]{0}', space=vmem, size = 0x2000, scoped, tag = 'output window, operand 0, single buffered']
    %10 = vsyncpa [#allocation3], 0
    %11 = vsyncpa [#allocation6], 0
    %12 = vsyncpa [#allocation4], 0
    // Predicated region
    $region2: #{tpu_custom_call.1} parent=1 // pred_check
      _
    $region3: #{tpu_custom_call.1} parent=1 // pred_check_branch
      %14 = sbr.rel (0) target = $region5
    $region4: #{tpu_custom_call.1} parent=1 // pred_region
      %s16 = ssub.s32 256, 256
      %17 = vsyncadd [#allocation3], %s16
      %s18 = sshll.u32 [#allocation2], 4
      %s19 = int_to_ptr.vmem [resolvable:$true] %s18
      %24 = dma.hbm_to_vmem [thread:$0]  %s0, 256, %s19, [#allocation3], 128, 128, 8
    $region5: #{tpu_custom_call.1} parent=1 // pred_fallthru
      _
    // Predicated region
    $region6: #{tpu_custom_call.1} parent=1 // pred_check
      _
    $region7: #{tpu_custom_call.1} parent=1 // pred_check_branch
      %26 = sbr.rel (0) target = $region9
    $region8: #{tpu_custom_call.1} parent=1 // pred_region
      %s28 = ssub.s32 6144, 6144
      %29 = vsyncadd [#allocation6], %s28
      %s30 = sshll.u32 [#allocation5], 4
      %s31 = int_to_ptr.vmem [resolvable:$true] %s30
      %36 = dma.hbm_to_vmem [thread:$0]  %s1, 6144, %s31, [#allocation6], 128, 128, 8
    $region9: #{tpu_custom_call.1} parent=1 // pred_fallthru
      _
    // Predicated region
    $region10: #{tpu_custom_call.1} parent=1 // pred_check
      _
    $region11: #{tpu_custom_call.1} parent=1 // pred_check_branch
      %38 = sbr.rel (0) target = $region13
    $region12: #{tpu_custom_call.1} parent=1 // pred_region
      _
    $region13: #{tpu_custom_call.1} parent=1 // pred_fallthru
      _
    // Predicated region
    $region14: #{tpu_custom_call.1} parent=1 // pred_check
      _
    $region15: #{tpu_custom_call.1} parent=1 // pred_check_branch
      %40 = sbr.rel (0) target = $region17
    $region16: #{tpu_custom_call.1} parent=1 // pred_region
      %s42 = ssub.s32 6144, 6144
      %43 = vsyncadd [#allocation6], %s42
      %s44 = sshll.u32 [#allocation7], 4
      %s45 = int_to_ptr.vmem [resolvable:$true] %s44
      %50 = dma.hbm_to_vmem [thread:$0]  %s3, 6144, %s45, [#allocation6], 128, 128, 8
    $region17: #{tpu_custom_call.1} parent=1 // pred_fallthru
      _
    // Predicated region
    $region18: #{tpu_custom_call.1} parent=1 // pred_check
      _
    $region19: #{tpu_custom_call.1} parent=1 // pred_check_branch
      %52 = sbr.rel (0) target = $region21
    $region20: #{tpu_custom_call.1} parent=1 // pred_region
      _
    $region21: #{tpu_custom_call.1} parent=1 // pred_fallthru
      _
    // Predicated region
    $region22: #{tpu_custom_call.1} parent=1 // pred_check
      _
    $region23: #{tpu_custom_call.1} parent=1 // pred_check_branch
      %54 = sbr.rel (0) target = $region25
    $region24: #{tpu_custom_call.1} parent=1 // pred_region
      %55 = dma.done [#allocation3], 256
    $region25: #{tpu_custom_call.1} parent=1 // pred_fallthru
      _
    // Predicated region
    $region26: #{tpu_custom_call.1} parent=1 // pred_check
      _
    $region27: #{tpu_custom_call.1} parent=1 // pred_check_branch
      %57 = sbr.rel (0) target = $region29
    $region28: #{tpu_custom_call.1} parent=1 // pred_region
      %58 = dma.done [#allocation6], 6144
    $region29: #{tpu_custom_call.1} parent=1 // pred_fallthru
      _
    // Predicated region
    $region30: #{tpu_custom_call.1} parent=1 // pred_check
      _
    $region31: #{tpu_custom_call.1} parent=1 // pred_check_branch
      %60 = sbr.rel (0) target = $region33
    $region32: #{tpu_custom_call.1} parent=1 // pred_region
      %61 = dma.done [#allocation6], 6144
    $region33: #{tpu_custom_call.1} parent=1 // pred_fallthru
      _
    %v62 = vld [vmem:[#allocation2] sm:$0xff]
    %v63 = vld [vmem:[#allocation2 + $0x8] sm:$0xff]
    %v64 = vlaneseq
    %v65 = vshrl.u32 %v64, 7
    %v66 = vadd.s32 %v65, 8
    %vm67 = vcmp.lt.s32.totalorder %v65, 0
    %v68 = vsub.s32 0, %v65
    %v69 = vsel %vm67, %v68, %v65
    %v70 = vshrl.u32 %v69, 3
    %v71 = vand.u32 %v69, 7
    %v72 = vsub.s32 0, %v71
    %v73 = vsel %vm67, %v72, %v71
    %vm74 = vcmp.lt.s32.totalorder %v66, 0
    %v75 = vsub.s32 0, %v66
    %v76 = vsel %vm74, %v75, %v66
    %v77 = vshrl.u32 %v76, 3
    %v78 = vand.u32 %v76, 7
    %v79 = vsub.s32 0, %v78
    %v80 = vsel %vm74, %v79, %v78
    %vm81 = vcmp.ne.s32.totalorder %v73, 0
    %vm82 = vcmp.ne.s32.totalorder %v80, 0
    %vm83 = vcmp.lt.s32.totalorder %v73, 0
    %vm84 = vcmp.lt.s32.totalorder %v80, 0
    %vm85 = vmand %vm83, %vm81
    %vm86 = vmand %vm84, %vm82
    %v87 = vadd.s32 %v73, 8
    %v88 = vadd.s32 %v80, 8
    %v89 = vsel %vm85, %v87, %v73
    %v90 = vsel %vm86, %v88, %v80
    %vm91 = vcmp.ne.s32.totalorder %v89, 0
    %vm92 = vcmp.ne.s32.totalorder %v90, 0
    %vm93 = vcmp.ne.s32.totalorder %v89, 7
    %vm94 = vcmp.ne.s32.totalorder %v90, 7
    %v95 = vld [vmem:[#allocation5] sm:$0xff]
    %v96 = vld [vmem:[#allocation5 + $0x8] sm:$0xff]
    %v97 = vld [vmem:[#allocation5 + $0x10] sm:$0xff]
    %v98 = vld [vmem:[#allocation5 + $0x18] sm:$0xff]
    %v99 = vld [vmem:[#allocation5 + $0x20] sm:$0xff]
    %v100 = vld [vmem:[#allocation5 + $0x28] sm:$0xff]
    %v101 = vld [vmem:[#allocation5 + $0x30] sm:$0xff]
    %v102 = vld [vmem:[#allocation5 + $0x38] sm:$0xff]
    %v103 = vld [vmem:[#allocation5 + $0x40] sm:$0xff]
    %v104 = vld [vmem:[#allocation5 + $0x48] sm:$0xff]
    %v105 = vld [vmem:[#allocation5 + $0x50] sm:$0xff]
    %v106 = vld [vmem:[#allocation5 + $0x58] sm:$0xff]
    %v107 = vld [vmem:[#allocation5 + $0x60] sm:$0xff]
    %v108 = vld [vmem:[#allocation5 + $0x68] sm:$0xff]
    %v109 = vld [vmem:[#allocation5 + $0x70] sm:$0xff]
    %v110 = vld [vmem:[#allocation5 + $0x78] sm:$0xff]
    %v111 = vld [vmem:[#allocation5 + $0x80] sm:$0xff]
    %v112 = vld [vmem:[#allocation5 + $0x88] sm:$0xff]
    %v113 = vld [vmem:[#allocation5 + $0x90] sm:$0xff]
    %v114 = vld [vmem:[#allocation5 + $0x98] sm:$0xff]
    %v115 = vld [vmem:[#allocation5 + $0xa0] sm:$0xff]
    %v116 = vld [vmem:[#allocation5 + $0xa8] sm:$0xff]
    %v117 = vld [vmem:[#allocation5 + $0xb0] sm:$0xff]
    %v118 = vld [vmem:[#allocation5 + $0xb8] sm:$0xff]
    %v119 = vld [vmem:[#allocation5 + $0xc0] sm:$0xff]
    %v120 = vld [vmem:[#allocation5 + $0xc8] sm:$0xff]
    %v121 = vld [vmem:[#allocation5 + $0xd0] sm:$0xff]
    %v122 = vld [vmem:[#allocation5 + $0xd8] sm:$0xff]
    %v123 = vld [vmem:[#allocation5 + $0xe0] sm:$0xff]
    %v124 = vld [vmem:[#allocation5 + $0xe8] sm:$0xff]
    %v125 = vld [vmem:[#allocation5 + $0xf0] sm:$0xff]
    %v126 = vld [vmem:[#allocation5 + $0xf8] sm:$0xff]
    %v127 = vld [vmem:[#allocation5 + $0x100] sm:$0xff]
    %v128 = vld [vmem:[#allocation5 + $0x108] sm:$0xff]
    %v129 = vld [vmem:[#allocation5 + $0x110] sm:$0xff]
    %v130 = vld [vmem:[#allocation5 + $0x118] sm:$0xff]
    %v131 = vld [vmem:[#allocation5 + $0x120] sm:$0xff]
    %v132 = vld [vmem:[#allocation5 + $0x128] sm:$0xff]
    %v133 = vld [vmem:[#allocation5 + $0x130] sm:$0xff]
    %v134 = vld [vmem:[#allocation5 + $0x138] sm:$0xff]
    %v135 = vld [vmem:[#allocation5 + $0x140] sm:$0xff]
    %v136 = vld [vmem:[#allocation5 + $0x148] sm:$0xff]
    %v137 = vld [vmem:[#allocation5 + $0x150] sm:$0xff]
    %v138 = vld [vmem:[#allocation5 + $0x158] sm:$0xff]
    %v139 = vld [vmem:[#allocation5 + $0x160] sm:$0xff]
    %v140 = vld [vmem:[#allocation5 + $0x168] sm:$0xff]
    %v141 = vld [vmem:[#allocation5 + $0x170] sm:$0xff]
    %v142 = vld [vmem:[#allocation5 + $0x178] sm:$0xff]
    %v143 = vld [vmem:[%s2] sm:$0x1]
    %v144 = vld [vmem:[#allocation7] sm:$0xff]
    %v145 = vld [vmem:[#allocation7 + $0x8] sm:$0xff]
    %v146 = vld [vmem:[#allocation7 + $0x10] sm:$0xff]
    %v147 = vld [vmem:[#allocation7 + $0x18] sm:$0xff]
    %v148 = vld [vmem:[#allocation7 + $0x20] sm:$0xff]
    %v149 = vld [vmem:[#allocation7 + $0x28] sm:$0xff]
    %v150 = vld [vmem:[#allocation7 + $0x30] sm:$0xff]
    %v151 = vld [vmem:[#allocation7 + $0x38] sm:$0xff]
    %v152 = vld [vmem:[#allocation7 + $0x40] sm:$0xff]
    %v153 = vld [vmem:[#allocation7 + $0x48] sm:$0xff]
    %v154 = vld [vmem:[#allocation7 + $0x50] sm:$0xff]
    %v155 = vld [vmem:[#allocation7 + $0x58] sm:$0xff]
    %v156 = vld [vmem:[#allocation7 + $0x60] sm:$0xff]
    %v157 = vld [vmem:[#allocation7 + $0x68] sm:$0xff]
    %v158 = vld [vmem:[#allocation7 + $0x70] sm:$0xff]
    %v159 = vld [vmem:[#allocation7 + $0x78] sm:$0xff]
    %v160 = vld [vmem:[#allocation7 + $0x80] sm:$0xff]
    %v161 = vld [vmem:[#allocation7 + $0x88] sm:$0xff]
    %v162 = vld [vmem:[#allocation7 + $0x90] sm:$0xff]
    %v163 = vld [vmem:[#allocation7 + $0x98] sm:$0xff]
    %v164 = vld [vmem:[#allocation7 + $0xa0] sm:$0xff]
    %v165 = vld [vmem:[#allocation7 + $0xa8] sm:$0xff]
    %v166 = vld [vmem:[#allocation7 + $0xb0] sm:$0xff]
    %v167 = vld [vmem:[#allocation7 + $0xb8] sm:$0xff]
    %v168 = vld [vmem:[#allocation7 + $0xc0] sm:$0xff]
    %v169 = vld [vmem:[#allocation7 + $0xc8] sm:$0xff]
    %v170 = vld [vmem:[#allocation7 + $0xd0] sm:$0xff]
    %v171 = vld [vmem:[#allocation7 + $0xd8] sm:$0xff]
    %v172 = vld [vmem:[#allocation7 + $0xe0] sm:$0xff]
    %v173 = vld [vmem:[#allocation7 + $0xe8] sm:$0xff]
    %v174 = vld [vmem:[#allocation7 + $0xf0] sm:$0xff]
    %v175 = vld [vmem:[#allocation7 + $0xf8] sm:$0xff]
    %v176 = vld [vmem:[#allocation7 + $0x100] sm:$0xff]
    %v177 = vld [vmem:[#allocation7 + $0x108] sm:$0xff]
    %v178 = vld [vmem:[#allocation7 + $0x110] sm:$0xff]
    %v179 = vld [vmem:[#allocation7 + $0x118] sm:$0xff]
    %v180 = vld [vmem:[#allocation7 + $0x120] sm:$0xff]
    %v181 = vld [vmem:[#allocation7 + $0x128] sm:$0xff]
    %v182 = vld [vmem:[#allocation7 + $0x130] sm:$0xff]
    %v183 = vld [vmem:[#allocation7 + $0x138] sm:$0xff]
    %v184 = vld [vmem:[#allocation7 + $0x140] sm:$0xff]
    %v185 = vld [vmem:[#allocation7 + $0x148] sm:$0xff]
    %v186 = vld [vmem:[#allocation7 + $0x150] sm:$0xff]
    %v187 = vld [vmem:[#allocation7 + $0x158] sm:$0xff]
    %v188 = vld [vmem:[#allocation7 + $0x160] sm:$0xff]
    %v189 = vld [vmem:[#allocation7 + $0x168] sm:$0xff]
    %v190 = vld [vmem:[#allocation7 + $0x170] sm:$0xff]
    %v191 = vld [vmem:[#allocation7 + $0x178] sm:$0xff]
    %v192 = vld [vmem:[%s4] sm:$0x1]
    %v193 = vrot.slane %v62, 7
    %v194 = vrot.slane %v63, 7
    %vm195 = vcmp.lt.s32.totalorder %v65, 1
    %v196 = vsel %vm195, %v193, %v194
    %v197 = vsel %vm195, %v194, %v193
    %v198 = vsel %vm91, 1, 0
    %v199 = vsel %vm92, 1, 0
    %vm200 = vcmp.eq.s32.totalorder %v198, 1
    %vm201 = vcmp.eq.s32.totalorder %v199, 1
    %v202 = vsel %vm200, %v197, 0.0
    %v203 = vsel %vm201, %v196, 0.0
    %v204 = vrot.slane %v62, 1
    %v205 = vrot.slane %v63, 1
    %vm206 = vcmp.lt.s32.totalorder %v65, 7
    %v207 = vsel %vm206, %v204, %v205
    %v208 = vsel %vm206, %v205, %v204
    %v209 = vsel %vm93, 1, 0
    %v210 = vsel %vm94, 1, 0
    %vm211 = vcmp.eq.s32.totalorder %v209, 1
    %vm212 = vcmp.eq.s32.totalorder %v210, 1
    %v213 = vsel %vm211, %v207, 0.0
    %v214 = vsel %vm212, %v208, 0.0
    %v216 = vlaneseq
    %v217 = vshrl.u32 %v216, 7
    %v218 = vsub.s32 0, %v217
    %v219 = vrot.slane %v143, %v218
    %221 = vmatprep.subr.mxu0 0.0
    %222 = vmatpush1.msra.mxu0 %v95
    %223 = vmatprep.subr.mxu0 0.0
    %224 = vmatpush1.msra.mxu0 %v96
    %225 = vmatprep.subr.mxu0 0.0
    %226 = vmatpush1.msra.mxu0 %v97
    %227 = vmatprep.subr.mxu0 0.0
    %228 = vmatpush1.msra.mxu0 %v98
    %229 = vmatprep.subr.mxu0 0.0
    %230 = vmatpush1.msra.mxu0 %v99
    %231 = vmatprep.subr.mxu0 0.0
    %232 = vmatpush1.msra.mxu0 %v100
    %233 = vmatprep.subr.mxu0 0.0
    %234 = vmatpush1.msra.mxu0 %v101
    %235 = vmatprep.subr.mxu0 0.0
    %236 = vmatpush1.msra.mxu0 %v102
    %237 = vmatprep.subr.mxu0 0.0
    %238 = vmatpush1.msra.mxu0 %v103
    %239 = vmatprep.subr.mxu0 0.0
    %240 = vmatpush1.msra.mxu0 %v104
    %241 = vmatprep.subr.mxu0 0.0
    %242 = vmatpush1.msra.mxu0 %v105
    %243 = vmatprep.subr.mxu0 0.0
    %244 = vmatpush1.msra.mxu0 %v106
    %245 = vmatprep.subr.mxu0 0.0
    %246 = vmatpush1.msra.mxu0 %v107
    %247 = vmatprep.subr.mxu0 0.0
    %248 = vmatpush1.msra.mxu0 %v108
    %249 = vmatprep.subr.mxu0 0.0
    %250 = vmatpush1.msra.mxu0 %v109
    %251 = vmatprep.subr.mxu0 0.0
    %252 = vmatpush1.msra.mxu0 %v110
    %253 = vmatprep.subr.mxu0 0.0
    %254 = vmatpush1.msra.mxu0 %v111
    %255 = vmatprep.subr.mxu0 0.0
    %256 = vmatpush1.msra.mxu0 %v112
    %257 = vmatprep.subr.mxu0 0.0
    %258 = vmatpush1.msra.mxu0 %v113
    %259 = vmatprep.subr.mxu0 0.0
    %260 = vmatpush1.msra.mxu0 %v114
    %261 = vmatprep.subr.mxu0 0.0
    %262 = vmatpush1.msra.mxu0 %v115
    %263 = vmatprep.subr.mxu0 0.0
    %264 = vmatpush1.msra.mxu0 %v116
    %265 = vmatprep.subr.mxu0 0.0
    %266 = vmatpush1.msra.mxu0 %v117
    %267 = vmatprep.subr.mxu0 0.0
    %268 = vmatpush1.msra.mxu0 %v118
    %269 = vmatprep.subr.mxu0 0.0
    %270 = vmatpush1.msra.mxu0 %v119
    %271 = vmatprep.subr.mxu0 0.0
    %272 = vmatpush1.msra.mxu0 %v120
    %273 = vmatprep.subr.mxu0 0.0
    %274 = vmatpush1.msra.mxu0 %v121
    %275 = vmatprep.subr.mxu0 0.0
    %276 = vmatpush1.msra.mxu0 %v122
    %277 = vmatprep.subr.mxu0 0.0
    %278 = vmatpush1.msra.mxu0 %v123
    %279 = vmatprep.subr.mxu0 0.0
    %280 = vmatpush1.msra.mxu0 %v124
    %281 = vmatprep.subr.mxu0 0.0
    %282 = vmatpush1.msra.mxu0 %v125
    %283 = vmatprep.subr.mxu0 0.0
    %284 = vmatpush1.msra.mxu0 %v126
    %285 = vmatprep.mubr.f32.mxu0 %v62
    %286 = vmatmul.mubr.f32.gmra.mrb[0].mxu0 %v202
    %v287 = vpop.f32.mrb[0].mxu0
    %v288 = vadd.f32 %v219, %v287
    %v289 = vpop.f32.mrb[0].mxu0
    %290 = vmatprep.mubr.f32.mxu0 %v63
    %291 = vmatmul.mubr.f32.gmra.mrb[0].mxu0 %v203
    %v292 = vpop.f32.mrb[0].mxu0
    %v293 = vadd.f32 %v219, %v292
    %v294 = vpop.f32.mrb[0].mxu0
    %295 = vdwg.mxu0
    %296 = vmatprep.subr.mxu0 0.0
    %297 = vmatpush1.msra.mxu0 %v127
    %298 = vmatprep.subr.mxu0 0.0
    %299 = vmatpush1.msra.mxu0 %v128
    %300 = vmatprep.subr.mxu0 0.0
    %301 = vmatpush1.msra.mxu0 %v129
    %302 = vmatprep.subr.mxu0 0.0
    %303 = vmatpush1.msra.mxu0 %v130
    %304 = vmatprep.subr.mxu0 0.0
    %305 = vmatpush1.msra.mxu0 %v131
    %306 = vmatprep.subr.mxu0 0.0
    %307 = vmatpush1.msra.mxu0 %v132
    %308 = vmatprep.subr.mxu0 0.0
    %309 = vmatpush1.msra.mxu0 %v133
    %310 = vmatprep.subr.mxu0 0.0
    %311 = vmatpush1.msra.mxu0 %v134
    %312 = vmatprep.subr.mxu0 0.0
    %313 = vmatpush1.msra.mxu0 %v135
    %314 = vmatprep.subr.mxu0 0.0
    %315 = vmatpush1.msra.mxu0 %v136
    %316 = vmatprep.subr.mxu0 0.0
    %317 = vmatpush1.msra.mxu0 %v137
    %318 = vmatprep.subr.mxu0 0.0
    %319 = vmatpush1.msra.mxu0 %v138
    %320 = vmatprep.subr.mxu0 0.0
    %321 = vmatpush1.msra.mxu0 %v139
    %322 = vmatprep.subr.mxu0 0.0
    %323 = vmatpush1.msra.mxu0 %v140
    %324 = vmatprep.subr.mxu0 0.0
    %325 = vmatpush1.msra.mxu0 %v141
    %326 = vmatprep.subr.mxu0 0.0
    %327 = vmatpush1.msra.mxu0 %v142
    %328 = vmatprep.subr.mxu0 0.0
    %329 = vmatpush1.msra.mxu0 0.0
    %330 = vmatprep.subr.mxu0 0.0
    %331 = vmatpush1.msra.mxu0 0.0
    %332 = vmatprep.subr.mxu0 0.0
    %333 = vmatpush1.msra.mxu0 0.0
    %334 = vmatprep.subr.mxu0 0.0
    %335 = vmatpush1.msra.mxu0 0.0
    %336 = vmatprep.subr.mxu0 0.0
    %337 = vmatpush1.msra.mxu0 0.0
    %338 = vmatprep.subr.mxu0 0.0
    %339 = vmatpush1.msra.mxu0 0.0
    %340 = vmatprep.subr.mxu0 0.0
    %341 = vmatpush1.msra.mxu0 0.0
    %342 = vmatprep.subr.mxu0 0.0
    %343 = vmatpush1.msra.mxu0 0.0
    %344 = vmatprep.subr.mxu0 0.0
    %345 = vmatpush1.msra.mxu0 0.0
    %346 = vmatprep.subr.mxu0 0.0
    %347 = vmatpush1.msra.mxu0 0.0
    %348 = vmatprep.subr.mxu0 0.0
    %349 = vmatpush1.msra.mxu0 0.0
    %350 = vmatprep.subr.mxu0 0.0
    %351 = vmatpush1.msra.mxu0 0.0
    %352 = vmatprep.subr.mxu0 0.0
    %353 = vmatpush1.msra.mxu0 0.0
    %354 = vmatprep.subr.mxu0 0.0
    %355 = vmatpush1.msra.mxu0 0.0
    %356 = vmatprep.subr.mxu0 0.0
    %357 = vmatpush1.msra.mxu0 0.0
    %358 = vmatprep.subr.mxu0 0.0
    %359 = vmatpush1.msra.mxu0 0.0
    %360 = vmatprep.mubr.f32.mxu0 0.0
    %361 = vmatmul.mubr.f32.gmra.mrb[0].mxu0 %v213
    %v362 = vpop.f32.mrb[0].mxu0
    %v363 = vadd.f32 %v288, %v362
    %v364 = vpop.f32.mrb[0].mxu0
    %365 = vmatprep.mubr.f32.mxu0 0.0
    %366 = vmatmul.mubr.f32.gmra.mrb[0].mxu0 %v214
    %v367 = vpop.f32.mrb[0].mxu0
    %v368 = vadd.f32 %v293, %v367
    %v369 = vpop.f32.mrb[0].mxu0
    %370 = vdwg.mxu0
    %vm371 = vcmp.ge.f32.partialorder %v363, 0.0
    %vm372 = vcmp.ge.f32.partialorder %v368, 0.0
    %v373 = vmul.f32 %v363, 0.01
    %v374 = vmul.f32 %v368, 0.01
    %v375 = vsel %vm371, %v363, %v373
    %v376 = vsel %vm372, %v368, %v374
    %v377 = vrot.slane %v375, 7
    %v378 = vrot.slane %v376, 7
    %v379 = vsel %vm195, %v377, %v378
    %v380 = vsel %vm195, %v378, %v377
    %v381 = vsel %vm200, %v380, 0.0
    %v382 = vsel %vm201, %v379, 0.0
    %v383 = vrot.slane %v375, 1
    %v384 = vrot.slane %v376, 1
    %v385 = vsel %vm206, %v383, %v384
    %v386 = vsel %vm206, %v384, %v383
    %v387 = vsel %vm211, %v385, 0.0
    %v388 = vsel %vm212, %v386, 0.0
    %v390 = vlaneseq
    %v391 = vshrl.u32 %v390, 7
    %v392 = vsub.s32 0, %v391
    %v393 = vrot.slane %v192, %v392
    %395 = vmatprep.subr.mxu0 0.0
    %396 = vmatpush1.msra.mxu0 %v144
    %397 = vmatprep.subr.mxu0 0.0
    %398 = vmatpush1.msra.mxu0 %v145
    %399 = vmatprep.subr.mxu0 0.0
    %400 = vmatpush1.msra.mxu0 %v146
    %401 = vmatprep.subr.mxu0 0.0
    %402 = vmatpush1.msra.mxu0 %v147
    %403 = vmatprep.subr.mxu0 0.0
    %404 = vmatpush1.msra.mxu0 %v148
    %405 = vmatprep.subr.mxu0 0.0
    %406 = vmatpush1.msra.mxu0 %v149
    %407 = vmatprep.subr.mxu0 0.0
    %408 = vmatpush1.msra.mxu0 %v150
    %409 = vmatprep.subr.mxu0 0.0
    %410 = vmatpush1.msra.mxu0 %v151
    %411 = vmatprep.subr.mxu0 0.0
    %412 = vmatpush1.msra.mxu0 %v152
    %413 = vmatprep.subr.mxu0 0.0
    %414 = vmatpush1.msra.mxu0 %v153
    %415 = vmatprep.subr.mxu0 0.0
    %416 = vmatpush1.msra.mxu0 %v154
    %417 = vmatprep.subr.mxu0 0.0
    %418 = vmatpush1.msra.mxu0 %v155
    %419 = vmatprep.subr.mxu0 0.0
    %420 = vmatpush1.msra.mxu0 %v156
    %421 = vmatprep.subr.mxu0 0.0
    %422 = vmatpush1.msra.mxu0 %v157
    %423 = vmatprep.subr.mxu0 0.0
    %424 = vmatpush1.msra.mxu0 %v158
    %425 = vmatprep.subr.mxu0 0.0
    %426 = vmatpush1.msra.mxu0 %v159
    %427 = vmatprep.subr.mxu0 0.0
    %428 = vmatpush1.msra.mxu0 %v160
    %429 = vmatprep.subr.mxu0 0.0
    %430 = vmatpush1.msra.mxu0 %v161
    %431 = vmatprep.subr.mxu0 0.0
    %432 = vmatpush1.msra.mxu0 %v162
    %433 = vmatprep.subr.mxu0 0.0
    %434 = vmatpush1.msra.mxu0 %v163
    %435 = vmatprep.subr.mxu0 0.0
    %436 = vmatpush1.msra.mxu0 %v164
    %437 = vmatprep.subr.mxu0 0.0
    %438 = vmatpush1.msra.mxu0 %v165
    %439 = vmatprep.subr.mxu0 0.0
    %440 = vmatpush1.msra.mxu0 %v166
    %441 = vmatprep.subr.mxu0 0.0
    %442 = vmatpush1.msra.mxu0 %v167
    %443 = vmatprep.subr.mxu0 0.0
    %444 = vmatpush1.msra.mxu0 %v168
    %445 = vmatprep.subr.mxu0 0.0
    %446 = vmatpush1.msra.mxu0 %v169
    %447 = vmatprep.subr.mxu0 0.0
    %448 = vmatpush1.msra.mxu0 %v170
    %449 = vmatprep.subr.mxu0 0.0
    %450 = vmatpush1.msra.mxu0 %v171
    %451 = vmatprep.subr.mxu0 0.0
    %452 = vmatpush1.msra.mxu0 %v172
    %453 = vmatprep.subr.mxu0 0.0
    %454 = vmatpush1.msra.mxu0 %v173
    %455 = vmatprep.subr.mxu0 0.0
    %456 = vmatpush1.msra.mxu0 %v174
    %457 = vmatprep.subr.mxu0 0.0
    %458 = vmatpush1.msra.mxu0 %v175
    %459 = vmatprep.mubr.f32.mxu0 %v375
    %460 = vmatmul.mubr.f32.gmra.mrb[0].mxu0 %v381
    %v461 = vpop.f32.mrb[0].mxu0
    %v462 = vadd.f32 %v393, %v461
    %v463 = vpop.f32.mrb[0].mxu0
    %464 = vmatprep.mubr.f32.mxu0 %v376
    %465 = vmatmul.mubr.f32.gmra.mrb[0].mxu0 %v382
    %v466 = vpop.f32.mrb[0].mxu0
    %v467 = vadd.f32 %v393, %v466
    %v468 = vpop.f32.mrb[0].mxu0
    %469 = vdwg.mxu0
    %470 = vmatprep.subr.mxu0 0.0
    %471 = vmatpush1.msra.mxu0 %v176
    %472 = vmatprep.subr.mxu0 0.0
    %473 = vmatpush1.msra.mxu0 %v177
    %474 = vmatprep.subr.mxu0 0.0
    %475 = vmatpush1.msra.mxu0 %v178
    %476 = vmatprep.subr.mxu0 0.0
    %477 = vmatpush1.msra.mxu0 %v179
    %478 = vmatprep.subr.mxu0 0.0
    %479 = vmatpush1.msra.mxu0 %v180
    %480 = vmatprep.subr.mxu0 0.0
    %481 = vmatpush1.msra.mxu0 %v181
    %482 = vmatprep.subr.mxu0 0.0
    %483 = vmatpush1.msra.mxu0 %v182
    %484 = vmatprep.subr.mxu0 0.0
    %485 = vmatpush1.msra.mxu0 %v183
    %486 = vmatprep.subr.mxu0 0.0
    %487 = vmatpush1.msra.mxu0 %v184
    %488 = vmatprep.subr.mxu0 0.0
    %489 = vmatpush1.msra.mxu0 %v185
    %490 = vmatprep.subr.mxu0 0.0
    %491 = vmatpush1.msra.mxu0 %v186
    %492 = vmatprep.subr.mxu0 0.0
    %493 = vmatpush1.msra.mxu0 %v187
    %494 = vmatprep.subr.mxu0 0.0
    %495 = vmatpush1.msra.mxu0 %v188
    %496 = vmatprep.subr.mxu0 0.0
    %497 = vmatpush1.msra.mxu0 %v189
    %498 = vmatprep.subr.mxu0 0.0
    %499 = vmatpush1.msra.mxu0 %v190
    %500 = vmatprep.subr.mxu0 0.0
    %501 = vmatpush1.msra.mxu0 %v191
    %502 = vmatprep.subr.mxu0 0.0
    %503 = vmatpush1.msra.mxu0 0.0
    %504 = vmatprep.subr.mxu0 0.0
    %505 = vmatpush1.msra.mxu0 0.0
    %506 = vmatprep.subr.mxu0 0.0
    %507 = vmatpush1.msra.mxu0 0.0
    %508 = vmatprep.subr.mxu0 0.0
    %509 = vmatpush1.msra.mxu0 0.0
    %510 = vmatprep.subr.mxu0 0.0
    %511 = vmatpush1.msra.mxu0 0.0
    %512 = vmatprep.subr.mxu0 0.0
    %513 = vmatpush1.msra.mxu0 0.0
    %514 = vmatprep.subr.mxu0 0.0
    %515 = vmatpush1.msra.mxu0 0.0
    %516 = vmatprep.subr.mxu0 0.0
    %517 = vmatpush1.msra.mxu0 0.0
    %518 = vmatprep.subr.mxu0 0.0
    %519 = vmatpush1.msra.mxu0 0.0
    %520 = vmatprep.subr.mxu0 0.0
    %521 = vmatpush1.msra.mxu0 0.0
    %522 = vmatprep.subr.mxu0 0.0
    %523 = vmatpush1.msra.mxu0 0.0
    %524 = vmatprep.subr.mxu0 0.0
    %525 = vmatpush1.msra.mxu0 0.0
    %526 = vmatprep.subr.mxu0 0.0
    %527 = vmatpush1.msra.mxu0 0.0
    %528 = vmatprep.subr.mxu0 0.0
    %529 = vmatpush1.msra.mxu0 0.0
    %530 = vmatprep.subr.mxu0 0.0
    %531 = vmatpush1.msra.mxu0 0.0
    %532 = vmatprep.subr.mxu0 0.0
    %533 = vmatpush1.msra.mxu0 0.0
    %534 = vmatprep.mubr.f32.mxu0 0.0
    %535 = vmatmul.mubr.f32.gmra.mrb[0].mxu0 %v387
    %v536 = vpop.f32.mrb[0].mxu0
    %v537 = vadd.f32 %v462, %v536
    %v538 = vpop.f32.mrb[0].mxu0
    %539 = vmatprep.mubr.f32.mxu0 0.0
    %540 = vmatmul.mubr.f32.gmra.mrb[0].mxu0 %v388
    %v541 = vpop.f32.mrb[0].mxu0
    %v542 = vadd.f32 %v467, %v541
    %v543 = vpop.f32.mrb[0].mxu0
    %544 = vdwg.mxu0
    %v545 = vadd.f32 %v62, %v537
    %v546 = vadd.f32 %v63, %v542
    %547 = vst [vmem:[#allocation8] sm:$0xff] %v545
    %548 = vst [vmem:[#allocation8 + $0x8] sm:$0xff] %v546
    // Predicated region
    $region34: #{tpu_custom_call.1} parent=1 // pred_check
      _
    $region35: #{tpu_custom_call.1} parent=1 // pred_check_branch
      %550 = sbr.rel (0) target = $region37
    $region36: #{tpu_custom_call.1} parent=1 // pred_region
      %s552 = ssub.s32 256, 256
      %553 = vsyncadd [#allocation4], %s552
      %s554 = sshll.u32 [#allocation8], 4
      %s555 = int_to_ptr.vmem [resolvable:$true] %s554
      %560 = dma.vmem_to_hbm [thread:$0]  %s555, 256, %s5, [#allocation4], 128, 128, 8
    $region37: #{tpu_custom_call.1} parent=1 // pred_fallthru
      _
    // Predicated region
    $region38: #{tpu_custom_call.1} parent=1 // pred_check
      _
    $region39: #{tpu_custom_call.1} parent=1 // pred_check_branch
      %562 = sbr.rel (0) target = $region41
    $region40: #{tpu_custom_call.1} parent=1 // pred_region
      %563 = dma.done [#allocation4], 256
    $region41: #{tpu_custom_call.1} parent=1 // pred_fallthru
      _
    %564 = vsyncpa [#allocation3], 1
    %565 = vsyncpa [#allocation6], 1
    %566 = vsyncpa [#allocation4], 1

</llo_original>
